<compile_context>
chip_gen: v6e
topology: v6e:2x2x1
jax: 0.10.0
libtpu: 0.0.40
codegen_flags: <defaults>
</compile_context>

<pallas_src>
import functools

import jax
import jax.numpy as jnp
from jax.experimental import pallas as pl
from jax.experimental.pallas import tpu as pltpu


def _cdiv(a, b):
    return -(-a // b)


def _round_up(a, b):
    return _cdiv(a, b) * b


def _vmem_budget_bytes():
    """~75% of per-core VMEM, capped at 96 MiB (v7x: 64 MiB -> 48 MiB budget;
    v5e/v6e: 128 MiB -> 96 MiB budget). Conservative 48 MiB fallback if the query
    is unavailable."""
    cap = None
    try:
        cap = getattr(pltpu.get_tpu_info(), "vmem_capacity_bytes", None)
    except Exception:
        cap = None
    if not cap:
        cap = 64 << 20
    return int(min(cap * 3 // 4, 96 << 20))


# ----------------------------------------------------------------------------
# Fused kernel:
#   x block      : (NB, C, HW_TILE)  f32   (channels on sublanes, HW on lanes)
#   w_fused      : (C, 1024)         f32   (backbone 1x1 conv @ Linear weight * 1/HW)
#   bias         : (1, 1024)         f32
#   out block    : (NB, 1024)        f32   (resident across the HW grid axis)
#   acc scratch  : (NB, C)           f32   (running spatial sum per sample)
# ----------------------------------------------------------------------------
def fused_pool_linear_kernel(x_ref, wf_ref, b_ref, o_ref, acc_ref, *, rem):
    hw = pl.program_id(1)
    last = pl.num_programs(1) - 1

    @pl.when(hw == 0)
    def _init():
        acc_ref[...] = jnp.zeros_like(acc_ref)

    if rem == 0:
        # HW divides evenly: plain partial spatial sum (NB, C, HW_TILE) -> (NB, C).
        acc_ref[...] += jnp.sum(x_ref[...], axis=2)
    else:
        # Ragged HW: mask the out-of-bounds lanes of the last tile before summing.
        @pl.when(hw != last)
        def _full_tile():
            acc_ref[...] += jnp.sum(x_ref[...], axis=2)

        @pl.when(hw == last)
        def _ragged_tile():
            lane = jax.lax.broadcasted_iota(jnp.int32, x_ref.shape, 2)
            masked = jnp.where(lane < rem, x_ref[...], 0.0)
            acc_ref[...] += jnp.sum(masked, axis=2)

    @pl.when(hw == last)
    def _finalize():
        # AdaptiveAvgPool2d((1,1)) + squeeze + backbone-1x1 + Linear(2048,1024),
        # all folded into one tiny (NB, C) @ (C, 1024) MXU matmul (the 1/HW mean
        # scale is pre-folded into wf). Exact only for the linear stand-in backbone.
        y = jnp.dot(acc_ref[...], wf_ref[...],
                    preferred_element_type=jnp.float32) + b_ref[...]
        o_ref[...] = y.astype(o_ref.dtype)


def fused_forward(x_ncs, backbone_w, linear_w, linear_b):
    """x_ncs: (N, C, HW) f32 -> (N, 1024) f32, fully fused in one pallas_call."""
    N, C, HW = x_ncs.shape
    D = linear_w.shape[1]

    # Fold the (linear) backbone 1x1 conv, the Linear weight and the 1/HW mean scale
    # into one (C, D) weight.  Tiny matmul, done by XLA outside the kernel; in a real
    # deployment this would be precomputed once. TODO(synk): revert when a real
    # nonlinear backbone replaces the stand-in.
    w_fused = (backbone_w @ linear_w.astype(jnp.float32)) * jnp.float32(1.0 / HW)
    b2 = linear_b.reshape(1, D).astype(jnp.float32)

    # --- N blocking: multiples of 8; >= 2 blocks on the parallel axis when N > 8 so
    # both v7x TensorCores get work. No padding of x: the last block is ragged and
    # its out-of-bounds output rows are masked by Pallas on write.
    if N <= 8:
        NB = 8
    else:
        NB = min(128, _round_up(_cdiv(N, 2), 8))
    n_blocks = _cdiv(N, NB)

    # --- HW tiling from the per-generation VMEM budget.
    budget = _vmem_budget_bytes()
    c_pad = _round_up(C, 8)                      # sublane padding of the x block
    fixed = (2 * NB * D * 4                      # out double-buffer
             + 4 * c_pad * D * 4                 # w_fused + bias (double-buffered)
             + NB * 128 * 4                      # acc scratch (lane-padded)
             + (2 << 20))                        # compiler slack
    x_budget = max(budget - fixed, 1 << 20)
    tile_cap = x_budget // (2 * NB * c_pad * 4)  # double-buffered x block rows
    tile_cap = max(128, (tile_cap // 128) * 128)
    if HW <= tile_cap:
        HW_TILE, rem = HW, 0                     # full extent (always legal)
    else:
        HW_TILE = min(tile_cap, 8192)            # multiple of 128
        rem = HW % HW_TILE
    hw_steps = _cdiv(HW, HW_TILE)

    grid = (n_blocks, hw_steps)

    out = pl.pallas_call(
        functools.partial(fused_pool_linear_kernel, rem=rem),
        out_shape=jax.ShapeDtypeStruct((N, D), jnp.float32),
        grid=grid,
        in_specs=[
            pl.BlockSpec((NB, C, HW_TILE), lambda n, h: (n, 0, h)),
            pl.BlockSpec((C, D), lambda n, h: (0, 0)),
            pl.BlockSpec((1, D), lambda n, h: (0, 0)),
        ],
        out_specs=pl.BlockSpec((NB, D), lambda n, h: (n, 0)),
        scratch_shapes=[pltpu.VMEM((NB, C), jnp.float32)],
        compiler_params=pltpu.CompilerParams(
            dimension_semantics=("parallel", "arbitrary"),
            vmem_limit_bytes=budget,
        ),
    )(x_ncs, w_fused, b2)

    return out


# ----------------------------------------------------------------------------
# Parameter init (deterministic, PyTorch-default-like uniform(-1/sqrt(fan_in), .))
# ----------------------------------------------------------------------------
def init_params(key, in_channels, psp_size=2048, linear_out=1024):
    k1, k2, k3 = jax.random.split(key, 3)
    bb_bound = 1.0 / jnp.sqrt(jnp.float32(in_channels))
    lin_bound = 1.0 / jnp.sqrt(jnp.float32(psp_size))
    return {
        # stand-in backbone 1x1 conv weight, stored (C_in, C_out), f32 (tiny)
        "backbone_w": jax.random.uniform(
            k1, (in_channels, psp_size), jnp.float32, -bb_bound, bb_bound
        ),
        # nn.Linear(2048, 1024): PyTorch weight is (out, in); stored transposed.
        # Kept in bf16 as the stored param; upcast to f32 when folded into w_fused.
        "linear_w": jax.random.uniform(
            k2, (psp_size, linear_out), jnp.float32, -lin_bound, lin_bound
        ).astype(jnp.bfloat16),
        "linear_b": jax.random.uniform(
            k3, (linear_out,), jnp.float32, -lin_bound, lin_bound
        ),
    }


# ----------------------------------------------------------------------------
# Forward pass (thin glue; all per-element compute inside the fused Pallas kernel)
# ----------------------------------------------------------------------------
def pspnet_forward(x, params):
    # x: (B, V, S, T, C, H, W) float32 — PyTorch NCHW on the trailing 4 dims.
    B, V, S, T, C, H, W = x.shape
    N = B * V * S * T
    # Pure reshape of NCHW (no transpose): (N, C, H*W).
    x_flat = x.reshape(N, C, H * W)
    out = fused_forward(
        x_flat, params["backbone_w"], params["linear_w"], params["linear_b"]
    )  # (N, 1024)
    return out.reshape(B, V, S, T, out.shape[-1])


if __name__ == "__main__":
    key = jax.random.PRNGKey(0)
    kx, kp = jax.random.split(key)

    # Small but module-consistent shapes: (B, V, S, T, C, H, W).
    B, V, S, T, C, H, W = 2, 1, 1, 2, 3, 32, 32
    x = jax.random.normal(kx, (B, V, S, T, C, H, W), dtype=jnp.float32)

    params = init_params(kp, in_channels=C, psp_size=2048, linear_out=1024)

    out = pspnet_forward(x, params)
    out = jax.block_until_ready(out)
    assert out.shape == (B, V, S, T, 1024), out.shape

    # Pure-JAX reference of the same math (pool -> stand-in conv -> linear).
    N = B * V * S * T
    xr = x.reshape(N, C, H * W)
    pooled = xr.mean(axis=2)                                    # (N, C)
    feats = pooled @ params["backbone_w"]                       # (N, 2048) f32
    ref = (
        feats @ params["linear_w"].astype(jnp.float32) + params["linear_b"]
    ).reshape(B, V, S, T, -1)

    assert jnp.allclose(out, ref, atol=1e-2, rtol=1e-2), float(
        jnp.max(jnp.abs(out - ref))
    )

    print("KERNEL_OK")
</pallas_src>

<mosaic_0001>
module attributes {stable_mosaic.version = 11 : i64} {
  func.func @fused_pool_linear_kernel(%arg0: i32, %arg1: i32, %arg2: memref<8x3x1024xf32, #tpu.memory_space<vmem>>, %arg3: memref<3x1024xf32, #tpu.memory_space<vmem>>, %arg4: memref<1x1024xf32, #tpu.memory_space<vmem>>, %arg5: memref<8x1024xf32, #tpu.memory_space<vmem>>, %arg6: memref<8x3xf32, #tpu.memory_space<vmem>>) attributes {dimension_semantics = [#tpu.dimension_semantics<parallel>, #tpu.dimension_semantics<arbitrary>], iteration_bounds = array<i64: 1, 1>, scalar_prefetch = 0 : i64, scratch_operands = 1 : i64, tpu.core_type = #tpu.core_type<tc>, window_params = [{transform_indices = @transform_0, window_bounds = array<i64: 8, 3, 1024>}, {pipeline_mode = #tpu.pipeline_mode<synchronous>, transform_indices = @transform_1, window_bounds = array<i64: 3, 1024>}, {pipeline_mode = #tpu.pipeline_mode<synchronous>, transform_indices = @transform_2, window_bounds = array<i64: 1, 1024>}, {transform_indices = @transform_3, window_bounds = array<i64: 8, 1024>}]} {
    %c0_i32 = arith.constant 0 : i32
    %0 = arith.cmpi eq, %arg1, %c0_i32 : i32
    %1 = arith.extui %0 : i1 to i32
    %c0_i32_0 = arith.constant 0 : i32
    %2 = arith.cmpi ne, %1, %c0_i32_0 : i32
    scf.if %2 {
      %cst_9 = arith.constant 0.000000e+00 : f32
      %11 = vector.broadcast %cst_9 : f32 to vector<8x3xf32>
      %c0_10 = arith.constant 0 : index
      %c0_11 = arith.constant 0 : index
      %12 = vector.load %arg6[%c0_10, %c0_11] : memref<8x3xf32, #tpu.memory_space<vmem>>, vector<8x3xf32>
      tpu.vector_store %arg6[%c0_10, %c0_11], %11 {strides = array<i32>} : memref<8x3xf32, #tpu.memory_space<vmem>>, vector<8x3xf32>,
    } else {
    }
    %c0 = arith.constant 0 : index
    %c0_1 = arith.constant 0 : index
    %3 = vector.load %arg6[%c0, %c0_1] : memref<8x3xf32, #tpu.memory_space<vmem>>, vector<8x3xf32>
    %c0_2 = arith.constant 0 : index
    %c0_3 = arith.constant 0 : index
    %c0_4 = arith.constant 0 : index
    %4 = vector.load %arg2[%c0_2, %c0_3, %c0_4] : memref<8x3x1024xf32, #tpu.memory_space<vmem>>, vector<8x3x1024xf32>
    %cst = arith.constant dense<0.000000e+00> : vector<8x3xf32>
    %5 = vector.multi_reduction <add>, %4, %cst [2] : vector<8x3x1024xf32> to vector<8x3xf32>
    %6 = arith.addf %3, %5 : vector<8x3xf32>
    %c0_5 = arith.constant 0 : index
    %c0_6 = arith.constant 0 : index
    %7 = vector.load %arg6[%c0_5, %c0_6] : memref<8x3xf32, #tpu.memory_space<vmem>>, vector<8x3xf32>
    tpu.vector_store %arg6[%c0_5, %c0_6], %6 {strides = array<i32>} : memref<8x3xf32, #tpu.memory_space<vmem>>, vector<8x3xf32>,
    %c0_i32_7 = arith.constant 0 : i32
    %8 = arith.cmpi eq, %arg1, %c0_i32_7 : i32
    %9 = arith.extui %8 : i1 to i32
    %c0_i32_8 = arith.constant 0 : i32
    %10 = arith.cmpi ne, %9, %c0_i32_8 : i32
    scf.if %10 {
      %c0_9 = arith.constant 0 : index
      %c0_10 = arith.constant 0 : index
      %11 = vector.load %arg6[%c0_9, %c0_10] : memref<8x3xf32, #tpu.memory_space<vmem>>, vector<8x3xf32>
      %c0_11 = arith.constant 0 : index
      %c0_12 = arith.constant 0 : index
      %12 = vector.load %arg3[%c0_11, %c0_12] : memref<3x1024xf32, #tpu.memory_space<vmem>>, vector<3x1024xf32>
      %cst_13 = arith.constant dense<0.000000e+00> : vector<8x1024xf32>
      %13 = tpu.matmul %11, %12, %cst_13 {dimension_numbers = #tpu.dot_dimension_numbers<[1], [0], [0], [1], [0, 0, 1, 1], [], []>} : vector<8x3xf32>, vector<3x1024xf32>, vector<8x1024xf32> -> vector<8x1024xf32>
      %c0_14 = arith.constant 0 : index
      %c0_15 = arith.constant 0 : index
      %14 = vector.load %arg4[%c0_14, %c0_15] : memref<1x1024xf32, #tpu.memory_space<vmem>>, vector<1x1024xf32>
      %15 = vector.broadcast %14 : vector<1x1024xf32> to vector<8x1024xf32>
      %16 = arith.addf %13, %15 : vector<8x1024xf32>
      %c0_16 = arith.constant 0 : index
      %c0_17 = arith.constant 0 : index
      %17 = vector.load %arg5[%c0_16, %c0_17] : memref<8x1024xf32, #tpu.memory_space<vmem>>, vector<8x1024xf32>
      tpu.vector_store %arg5[%c0_16, %c0_17], %16 {strides = array<i32>} : memref<8x1024xf32, #tpu.memory_space<vmem>>, vector<8x1024xf32>,
    } else {
    }
    return
  }
  func.func @transform_0(%arg0: i32, %arg1: i32) -> (i32, i32, i32) {
    %c0_i32 = arith.constant 0 : i32
    %c0_i32_0 = arith.constant 0 : i32
    return %arg0, %c0_i32, %arg1 : i32, i32, i32
  }
  func.func @transform_1(%arg0: i32, %arg1: i32) -> (i32, i32) {
    %c0_i32 = arith.constant 0 : i32
    %c0_i32_0 = arith.constant 0 : i32
    %c0_i32_1 = arith.constant 0 : i32
    return %c0_i32, %c0_i32_0 : i32, i32
  }
  func.func @transform_2(%arg0: i32, %arg1: i32) -> (i32, i32) {
    %c0_i32 = arith.constant 0 : i32
    %c0_i32_0 = arith.constant 0 : i32
    %c0_i32_1 = arith.constant 0 : i32
    return %c0_i32, %c0_i32_0 : i32, i32
  }
  func.func @transform_3(%arg0: i32, %arg1: i32) -> (i32, i32) {
    %c0_i32 = arith.constant 0 : i32
    %c0_i32_0 = arith.constant 0 : i32
    return %arg0, %c0_i32 : i32, i32
  }
}

</mosaic_0001>

<llo_original>
// kernel: tpu_custom_call.1
$region0: #{tpu_custom_call.1}
  #allocation0 [shape = 'u32[]', space=smem, size = 0x4, offset = 0x4, fixed_abs, tag = 'smem constant byte address 0x4 - core index']
  #allocation1 [shape = 'u32[144,128]{1,0:T(1,128)}', space=vmem, size = 0x12000, scoped, tag = 'internal scratch']
  #allocation2 [shape = 'f32[8,3]{1,0:T(8,128)}', space=vmem, size = 0x1000, scoped, tag = 'scratch operand']
  %s0 = inlined_call_operand.vmem [shape: f32[4,3,1024], index: 0, kind: input, shape index: {}]
  %s1 = inlined_call_operand.vmem [shape: f32[3,1024], index: 1, kind: input, shape index: {}]
  %s2 = inlined_call_operand.vmem [shape: f32[1,1024], index: 2, kind: input, shape index: {}]
  %s3 = inlined_call_operand.hbm [shape: f32[4,1024], index: 3, kind: output, shape index: {}]
  %s4 = sld [smem:[#allocation0]]
  $region30: #{tpu_custom_call.1} parent=0
    _
  %s6 = ssub.s32 1, %s4
  %s7 = scalar_select 0, %s6, %s4
  $region1: #{tpu_custom_call.1} parent=0
    #allocation3 [shape = 'u8[32768]{0}', space=vmem, size = 0x8000, scoped, tag = 'output window, operand 0, single buffered']
    #allocation4 [shape = 's32[1]{0}', space=sflag, size = 0x4, scoped, tag = 'scoped memory for tpu_custom_call.1']
    %8 = vsyncpa [#allocation4], 0
    // Predicated region
    $region2: #{tpu_custom_call.1} parent=1 // pred_check
      _
    $region3: #{tpu_custom_call.1} parent=1 // pred_check_branch
      %10 = sbr.rel (0) target = $region5
    $region4: #{tpu_custom_call.1} parent=1 // pred_region
      _
    $region5: #{tpu_custom_call.1} parent=1 // pred_fallthru
      _
    // Predicated region
    $region6: #{tpu_custom_call.1} parent=1 // pred_check
      _
    $region7: #{tpu_custom_call.1} parent=1 // pred_check_branch
      %12 = sbr.rel (0) target = $region9
    $region8: #{tpu_custom_call.1} parent=1 // pred_region
      _
    $region9: #{tpu_custom_call.1} parent=1 // pred_fallthru
      _
    // Predicated region
    $region10: #{tpu_custom_call.1} parent=1 // pred_check
      _
    $region11: #{tpu_custom_call.1} parent=1 // pred_check_branch
      %14 = sbr.rel (0) target = $region13
    $region12: #{tpu_custom_call.1} parent=1 // pred_region
      _
    $region13: #{tpu_custom_call.1} parent=1 // pred_fallthru
      _
    %p15 = scmp.eq.s32.totalorder 0, 0
    // Predicated region
    $region14: #{tpu_custom_call.1} parent=1 // pred_check
      %p16 = pneg %p15
    $region15: #{tpu_custom_call.1} parent=1 // pred_check_branch
      %18 = sbr.rel (%p16) target = $region17
    $region16: #{tpu_custom_call.1} parent=1 // pred_region
      %vm19 = vcmask 23552
      %20 = vst.msk [vmem:[#allocation2] sm:$0xff] %vm19, 0.0
    $region17: #{tpu_custom_call.1} parent=1 // pred_fallthru
      _
    %v21 = vld [vmem:[#allocation2] sm:$0xff]
    %v22 = vld [vmem:[%s0] sm:$0x77]
    %v23 = vld [vmem:[%s0 + $0x8] sm:$0x77]
    %v24 = vld [vmem:[%s0 + $0x10] sm:$0x77]
    %v25 = vld [vmem:[%s0 + $0x18] sm:$0x77]
    %v26 = vld [vmem:[%s0 + $0x20] sm:$0x77]
    %v27 = vld [vmem:[%s0 + $0x28] sm:$0x77]
    %v28 = vld [vmem:[%s0 + $0x30] sm:$0x77]
    %v29 = vld [vmem:[%s0 + $0x38] sm:$0x77]
    %v30 = vld [vmem:[%s0 + $0x40] sm:$0x77]
    %v31 = vld [vmem:[%s0 + $0x48] sm:$0x77]
    %v32 = vld [vmem:[%s0 + $0x50] sm:$0x77]
    %v33 = vld [vmem:[%s0 + $0x58] sm:$0x77]
    %v34 = vld [vmem:[%s0 + $0x60] sm:$0x77]
    %v35 = vld [vmem:[%s0 + $0x68] sm:$0x77]
    %v36 = vld [vmem:[%s0 + $0x70] sm:$0x77]
    %v37 = vld [vmem:[%s0 + $0x78] sm:$0x77]
    %v38 = vld [vmem:[%s0 + $0x80] sm:$0x77]
    %v39 = vld [vmem:[%s0 + $0x88] sm:$0x77]
    %v40 = vld [vmem:[%s0 + $0x90] sm:$0x77]
    %v41 = vld [vmem:[%s0 + $0x98] sm:$0x77]
    %v42 = vld [vmem:[%s0 + $0xa0] sm:$0x77]
    %v43 = vld [vmem:[%s0 + $0xa8] sm:$0x77]
    %v44 = vld [vmem:[%s0 + $0xb0] sm:$0x77]
    %v45 = vld [vmem:[%s0 + $0xb8] sm:$0x77]
    %v46 = vld [vmem:[%s0 + $0xc0] sm:$0x77]
    %v47 = vld [vmem:[%s0 + $0xc8] sm:$0x77]
    %v48 = vld [vmem:[%s0 + $0xd0] sm:$0x77]
    %v49 = vld [vmem:[%s0 + $0xd8] sm:$0x77]
    %v50 = vld [vmem:[%s0 + $0xe0] sm:$0x77]
    %v51 = vld [vmem:[%s0 + $0xe8] sm:$0x77]
    %v52 = vld [vmem:[%s0 + $0xf0] sm:$0x77]
    %v53 = vld [vmem:[%s0 + $0xf8] sm:$0x77]
    %v86 = vcombine.high %v22, %v22
    %v87 = vcombine.high %v23, %v23
    %v88 = vcombine.high %v24, %v24
    %v89 = vcombine.high %v25, %v25
    %v90 = vcombine.high %v26, %v26
    %v91 = vcombine.high %v27, %v27
    %v92 = vcombine.high %v28, %v28
    %v93 = vcombine.high %v29, %v29
    %v94 = vcombine.high %v30, %v30
    %v95 = vcombine.high %v31, %v31
    %v96 = vcombine.high %v32, %v32
    %v97 = vcombine.high %v33, %v33
    %v98 = vcombine.high %v34, %v34
    %v99 = vcombine.high %v35, %v35
    %v100 = vcombine.high %v36, %v36
    %v101 = vcombine.high %v37, %v37
    %v102 = vcombine.high %v38, %v38
    %v103 = vcombine.high %v39, %v39
    %v104 = vcombine.high %v40, %v40
    %v105 = vcombine.high %v41, %v41
    %v106 = vcombine.high %v42, %v42
    %v107 = vcombine.high %v43, %v43
    %v108 = vcombine.high %v44, %v44
    %v109 = vcombine.high %v45, %v45
    %v110 = vcombine.high %v46, %v46
    %v111 = vcombine.high %v47, %v47
    %v112 = vcombine.high %v48, %v48
    %v113 = vcombine.high %v49, %v49
    %v114 = vcombine.high %v50, %v50
    %v115 = vcombine.high %v51, %v51
    %v116 = vcombine.high %v52, %v52
    %v117 = vcombine.high %v53, %v53
    %vm150 = vcmask 1042432
    %v151 = vsel %vm150, %v22, 0.0
    %v152 = vsel %vm150, %v86, 0.0
    %v153 = vadd.f32 %v151, %v152
    %v154 = vsel %vm150, %v23, 0.0
    %v155 = vadd.f32 %v153, %v154
    %v156 = vsel %vm150, %v87, 0.0
    %v157 = vadd.f32 %v155, %v156
    %v158 = vsel %vm150, %v24, 0.0
    %v159 = vadd.f32 %v157, %v158
    %v160 = vsel %vm150, %v88, 0.0
    %v161 = vadd.f32 %v159, %v160
    %v162 = vsel %vm150, %v25, 0.0
    %v163 = vadd.f32 %v161, %v162
    %v164 = vsel %vm150, %v89, 0.0
    %v165 = vadd.f32 %v163, %v164
    %166 = vadd.xlane.f32.xlu0 %v165
    %v167 = vpop.xlane.xlu0 %166
    %v168 = vsel %vm150, %v26, 0.0
    %v169 = vsel %vm150, %v90, 0.0
    %v170 = vadd.f32 %v168, %v169
    %v171 = vsel %vm150, %v27, 0.0
    %v172 = vadd.f32 %v170, %v171
    %v173 = vsel %vm150, %v91, 0.0
    %v174 = vadd.f32 %v172, %v173
    %v175 = vsel %vm150, %v28, 0.0
    %v176 = vadd.f32 %v174, %v175
    %v177 = vsel %vm150, %v92, 0.0
    %v178 = vadd.f32 %v176, %v177
    %v179 = vsel %vm150, %v29, 0.0
    %v180 = vadd.f32 %v178, %v179
    %v181 = vsel %vm150, %v93, 0.0
    %v182 = vadd.f32 %v180, %v181
    %183 = vadd.xlane.f32.xlu0 %v182
    %v184 = vpop.xlane.xlu0 %183
    %v185 = vsel %vm150, %v30, 0.0
    %v186 = vsel %vm150, %v94, 0.0
    %v187 = vadd.f32 %v185, %v186
    %v188 = vsel %vm150, %v31, 0.0
    %v189 = vadd.f32 %v187, %v188
    %v190 = vsel %vm150, %v95, 0.0
    %v191 = vadd.f32 %v189, %v190
    %v192 = vsel %vm150, %v32, 0.0
    %v193 = vadd.f32 %v191, %v192
    %v194 = vsel %vm150, %v96, 0.0
    %v195 = vadd.f32 %v193, %v194
    %v196 = vsel %vm150, %v33, 0.0
    %v197 = vadd.f32 %v195, %v196
    %v198 = vsel %vm150, %v97, 0.0
    %v199 = vadd.f32 %v197, %v198
    %200 = vadd.xlane.f32.xlu0 %v199
    %v201 = vpop.xlane.xlu0 %200
    %v202 = vsel %vm150, %v34, 0.0
    %v203 = vsel %vm150, %v98, 0.0
    %v204 = vadd.f32 %v202, %v203
    %v205 = vsel %vm150, %v35, 0.0
    %v206 = vadd.f32 %v204, %v205
    %v207 = vsel %vm150, %v99, 0.0
    %v208 = vadd.f32 %v206, %v207
    %v209 = vsel %vm150, %v36, 0.0
    %v210 = vadd.f32 %v208, %v209
    %v211 = vsel %vm150, %v100, 0.0
    %v212 = vadd.f32 %v210, %v211
    %v213 = vsel %vm150, %v37, 0.0
    %v214 = vadd.f32 %v212, %v213
    %v215 = vsel %vm150, %v101, 0.0
    %v216 = vadd.f32 %v214, %v215
    %217 = vadd.xlane.f32.xlu0 %v216
    %v218 = vpop.xlane.xlu0 %217
    %v219 = vsel %vm150, %v38, 0.0
    %v220 = vsel %vm150, %v102, 0.0
    %v221 = vadd.f32 %v219, %v220
    %v222 = vsel %vm150, %v39, 0.0
    %v223 = vadd.f32 %v221, %v222
    %v224 = vsel %vm150, %v103, 0.0
    %v225 = vadd.f32 %v223, %v224
    %v226 = vsel %vm150, %v40, 0.0
    %v227 = vadd.f32 %v225, %v226
    %v228 = vsel %vm150, %v104, 0.0
    %v229 = vadd.f32 %v227, %v228
    %v230 = vsel %vm150, %v41, 0.0
    %v231 = vadd.f32 %v229, %v230
    %v232 = vsel %vm150, %v105, 0.0
    %v233 = vadd.f32 %v231, %v232
    %234 = vadd.xlane.f32.xlu0 %v233
    %v235 = vpop.xlane.xlu0 %234
    %v236 = vsel %vm150, %v42, 0.0
    %v237 = vsel %vm150, %v106, 0.0
    %v238 = vadd.f32 %v236, %v237
    %v239 = vsel %vm150, %v43, 0.0
    %v240 = vadd.f32 %v238, %v239
    %v241 = vsel %vm150, %v107, 0.0
    %v242 = vadd.f32 %v240, %v241
    %v243 = vsel %vm150, %v44, 0.0
    %v244 = vadd.f32 %v242, %v243
    %v245 = vsel %vm150, %v108, 0.0
    %v246 = vadd.f32 %v244, %v245
    %v247 = vsel %vm150, %v45, 0.0
    %v248 = vadd.f32 %v246, %v247
    %v249 = vsel %vm150, %v109, 0.0
    %v250 = vadd.f32 %v248, %v249
    %251 = vadd.xlane.f32.xlu0 %v250
    %v252 = vpop.xlane.xlu0 %251
    %v253 = vsel %vm150, %v46, 0.0
    %v254 = vsel %vm150, %v110, 0.0
    %v255 = vadd.f32 %v253, %v254
    %v256 = vsel %vm150, %v47, 0.0
    %v257 = vadd.f32 %v255, %v256
    %v258 = vsel %vm150, %v111, 0.0
    %v259 = vadd.f32 %v257, %v258
    %v260 = vsel %vm150, %v48, 0.0
    %v261 = vadd.f32 %v259, %v260
    %v262 = vsel %vm150, %v112, 0.0
    %v263 = vadd.f32 %v261, %v262
    %v264 = vsel %vm150, %v49, 0.0
    %v265 = vadd.f32 %v263, %v264
    %v266 = vsel %vm150, %v113, 0.0
    %v267 = vadd.f32 %v265, %v266
    %268 = vadd.xlane.f32.xlu0 %v267
    %v269 = vpop.xlane.xlu0 %268
    %v270 = vsel %vm150, %v50, 0.0
    %v271 = vsel %vm150, %v114, 0.0
    %v272 = vadd.f32 %v270, %v271
    %v273 = vsel %vm150, %v51, 0.0
    %v274 = vadd.f32 %v272, %v273
    %v275 = vsel %vm150, %v115, 0.0
    %v276 = vadd.f32 %v274, %v275
    %v277 = vsel %vm150, %v52, 0.0
    %v278 = vadd.f32 %v276, %v277
    %v279 = vsel %vm150, %v116, 0.0
    %v280 = vadd.f32 %v278, %v279
    %v281 = vsel %vm150, %v53, 0.0
    %v282 = vadd.f32 %v280, %v281
    %v283 = vsel %vm150, %v117, 0.0
    %v284 = vadd.f32 %v282, %v283
    %285 = vadd.xlane.f32.xlu0 %v284
    %v286 = vpop.xlane.xlu0 %285
    %v295 = vlaneseq
    %v296 = vand.u32 %v295, 127
    %v297 = vlaneseq
    %v298 = vshrl.u32 %v297, 7
    %v299 = vsub.s32 %v296, %v298
    %v300 = vrot.slane %v167, %v299
    %v301 = vlaneseq
    %v302 = vshrl.u32 %v301, 7
    %v303 = vsub.s32 %v296, %v302
    %v304 = vrot.slane %v184, %v303
    %v305 = vlaneseq
    %v306 = vshrl.u32 %v305, 7
    %v307 = vsub.s32 %v296, %v306
    %v308 = vrot.slane %v201, %v307
    %v309 = vlaneseq
    %v310 = vshrl.u32 %v309, 7
    %v311 = vsub.s32 %v296, %v310
    %v312 = vrot.slane %v218, %v311
    %v313 = vlaneseq
    %v314 = vshrl.u32 %v313, 7
    %v315 = vsub.s32 %v296, %v314
    %v316 = vrot.slane %v235, %v315
    %v317 = vlaneseq
    %v318 = vshrl.u32 %v317, 7
    %v319 = vsub.s32 %v296, %v318
    %v320 = vrot.slane %v252, %v319
    %v321 = vlaneseq
    %v322 = vshrl.u32 %v321, 7
    %v323 = vsub.s32 %v296, %v322
    %v324 = vrot.slane %v269, %v323
    %v325 = vlaneseq
    %v326 = vshrl.u32 %v325, 7
    %v327 = vsub.s32 %v296, %v326
    %v328 = vrot.slane %v286, %v327
    %vm329 = vcmask 1041409
    %v330 = vsel %vm329, %v304, %v300
    %vm331 = vcmask 1042434
    %v332 = vsel %vm331, %v308, %v330
    %vm333 = vcmask 1043459
    %v334 = vsel %vm333, %v312, %v332
    %vm335 = vcmask 1044484
    %v336 = vsel %vm335, %v316, %v334
    %vm337 = vcmask 1045509
    %v338 = vsel %vm337, %v320, %v336
    %vm339 = vcmask 1046534
    %v340 = vsel %vm339, %v324, %v338
    %vm341 = vcmask 1047559
    %v342 = vsel %vm341, %v328, %v340
    %v344 = vadd.f32 %v21, %v342
    %vm345 = vcmask 23552
    %346 = vst.msk [vmem:[#allocation2] sm:$0xff] %vm345, %v344
    // Predicated region
    $region18: #{tpu_custom_call.1} parent=1 // pred_check
      %p347 = pneg %p15
    $region19: #{tpu_custom_call.1} parent=1 // pred_check_branch
      %349 = sbr.rel (%p347) target = $region21
    $region20: #{tpu_custom_call.1} parent=1 // pred_region
      %v350 = vld [vmem:[#allocation2] sm:$0xff]
      %v351 = vld [vmem:[%s1] sm:$0x77]
      %v352 = vld [vmem:[%s1 + $0x8] sm:$0x77]
      %v353 = vld [vmem:[%s1 + $0x10] sm:$0x77]
      %v354 = vld [vmem:[%s1 + $0x18] sm:$0x77]
      %v355 = vld [vmem:[%s2] sm:$0xff]
      %v357 = vlaneseq
      %v358 = vshrl.u32 %v357, 7
      %v359 = vsub.s32 0, %v358
      %v360 = vrot.slane %v355, %v359
      %v361 = vlaneseq
      %v362 = vshrl.u32 %v361, 7
      %v363 = vsub.s32 1, %v362
      %v364 = vrot.slane %v355, %v363
      %v365 = vlaneseq
      %v366 = vshrl.u32 %v365, 7
      %v367 = vsub.s32 2, %v366
      %v368 = vrot.slane %v355, %v367
      %v369 = vlaneseq
      %v370 = vshrl.u32 %v369, 7
      %v371 = vsub.s32 3, %v370
      %v372 = vrot.slane %v355, %v371
      %v373 = vlaneseq
      %v374 = vshrl.u32 %v373, 7
      %v375 = vsub.s32 4, %v374
      %v376 = vrot.slane %v355, %v375
      %v377 = vlaneseq
      %v378 = vshrl.u32 %v377, 7
      %v379 = vsub.s32 5, %v378
      %v380 = vrot.slane %v355, %v379
      %v381 = vlaneseq
      %v382 = vshrl.u32 %v381, 7
      %v383 = vsub.s32 6, %v382
      %v384 = vrot.slane %v355, %v383
      %v385 = vlaneseq
      %v386 = vshrl.u32 %v385, 7
      %v387 = vsub.s32 7, %v386
      %v388 = vrot.slane %v355, %v387
      %v401 = vcombine.high %v351, %v351
      %v402 = vcombine.high %v352, %v352
      %v403 = vcombine.high %v353, %v353
      %v404 = vcombine.high %v354, %v354
      %v406 = vsel %vm345, %v350, 0
      %v408 = vsel %vm150, %v351, 0
      %v410 = vsel %vm150, %v401, 0
      %v412 = vsel %vm150, %v352, 0
      %v414 = vsel %vm150, %v402, 0
      %v416 = vsel %vm150, %v353, 0
      %v418 = vsel %vm150, %v403, 0
      %v420 = vsel %vm150, %v354, 0
      %v422 = vsel %vm150, %v404, 0
      %424 = vmatprep.subr.mxu0 0.0
      %425 = vmatpush1.msra.mxu0 0.0
      %426 = vmatprep.subr.mxu0 0.0
      %427 = vmatpush1.msra.mxu0 0.0
      %428 = vmatprep.subr.mxu0 0.0
      %429 = vmatpush1.msra.mxu0 0.0
      %430 = vmatprep.subr.mxu0 0.0
      %431 = vmatpush1.msra.mxu0 0.0
      %432 = vmatprep.subr.mxu0 0.0
      %433 = vmatpush1.msra.mxu0 0.0
      %434 = vmatprep.subr.mxu0 0.0
      %435 = vmatpush1.msra.mxu0 0.0
      %436 = vmatprep.subr.mxu0 0.0
      %437 = vmatpush1.msra.mxu0 0.0
      %438 = vmatprep.subr.mxu0 0.0
      %439 = vmatpush1.msra.mxu0 0.0
      %440 = vmatprep.subr.mxu0 0.0
      %441 = vmatpush1.msra.mxu0 0.0
      %442 = vmatprep.subr.mxu0 0.0
      %443 = vmatpush1.msra.mxu0 0.0
      %444 = vmatprep.subr.mxu0 0.0
      %445 = vmatpush1.msra.mxu0 0.0
      %446 = vmatprep.subr.mxu0 0.0
      %447 = vmatpush1.msra.mxu0 0.0
      %448 = vmatprep.subr.mxu0 0.0
      %449 = vmatpush1.msra.mxu0 0.0
      %450 = vmatprep.subr.mxu0 0.0
      %451 = vmatpush1.msra.mxu0 0.0
      %452 = vmatprep.subr.mxu0 0.0
      %453 = vmatpush1.msra.mxu0 0.0
      %454 = vmatprep.subr.mxu0 %v410
      %455 = vmatpush1.msra.mxu0 %v408
      %456 = vmatprep.subr.mxu0 0.0
      %457 = vmatpush2.msra.mxu0 0.0
      %458 = vmatprep.subr.mxu0 0.0
      %459 = vmatpush2.msra.mxu0 0.0
      %460 = vmatprep.subr.mxu0 0.0
      %461 = vmatpush2.msra.mxu0 0.0
      %462 = vmatprep.subr.mxu0 0.0
      %463 = vmatpush2.msra.mxu0 0.0
      %464 = vmatprep.subr.mxu0 0.0
      %465 = vmatpush2.msra.mxu0 0.0
      %466 = vmatprep.subr.mxu0 0.0
      %467 = vmatpush2.msra.mxu0 0.0
      %468 = vmatprep.subr.mxu0 0.0
      %469 = vmatpush2.msra.mxu0 0.0
      %470 = vmatprep.subr.mxu0 0.0
      %471 = vmatpush2.msra.mxu0 0.0
      %472 = vmatprep.subr.mxu0 0.0
      %473 = vmatpush2.msra.mxu0 0.0
      %474 = vmatprep.subr.mxu0 0.0
      %475 = vmatpush2.msra.mxu0 0.0
      %476 = vmatprep.subr.mxu0 0.0
      %477 = vmatpush2.msra.mxu0 0.0
      %478 = vmatprep.subr.mxu0 0.0
      %479 = vmatpush2.msra.mxu0 0.0
      %480 = vmatprep.subr.mxu0 0.0
      %481 = vmatpush2.msra.mxu0 0.0
      %482 = vmatprep.subr.mxu0 0.0
      %483 = vmatpush2.msra.mxu0 0.0
      %484 = vmatprep.subr.mxu0 0.0
      %485 = vmatpush2.msra.mxu0 0.0
      %486 = vmatprep.subr.mxu0 0.0
      %487 = vmatpush2.msra.mxu0 0.0
      %488 = vmatprep.mubr.f32.mxu0 0.0
      %489 = vmatmul.mubr.f32.gmra.mxu0 %v406
      %v490 = vpop.f32.mrf.mxu0
      %v491 = vadd.f32 %v360, %v490
      %v492 = vpop.f32.mrf.mxu0
      %v493 = vadd.f32 %v364, %v492
      %494 = vdwg.mxu0
      %495 = vmatprep.subr.mxu0 0.0
      %496 = vmatpush1.msra.mxu0 0.0
      %497 = vmatprep.subr.mxu0 0.0
      %498 = vmatpush1.msra.mxu0 0.0
      %499 = vmatprep.subr.mxu0 0.0
      %500 = vmatpush1.msra.mxu0 0.0
      %501 = vmatprep.subr.mxu0 0.0
      %502 = vmatpush1.msra.mxu0 0.0
      %503 = vmatprep.subr.mxu0 0.0
      %504 = vmatpush1.msra.mxu0 0.0
      %505 = vmatprep.subr.mxu0 0.0
      %506 = vmatpush1.msra.mxu0 0.0
      %507 = vmatprep.subr.mxu0 0.0
      %508 = vmatpush1.msra.mxu0 0.0
      %509 = vmatprep.subr.mxu0 0.0
      %510 = vmatpush1.msra.mxu0 0.0
      %511 = vmatprep.subr.mxu0 0.0
      %512 = vmatpush1.msra.mxu0 0.0
      %513 = vmatprep.subr.mxu0 0.0
      %514 = vmatpush1.msra.mxu0 0.0
      %515 = vmatprep.subr.mxu0 0.0
      %516 = vmatpush1.msra.mxu0 0.0
      %517 = vmatprep.subr.mxu0 0.0
      %518 = vmatpush1.msra.mxu0 0.0
      %519 = vmatprep.subr.mxu0 0.0
      %520 = vmatpush1.msra.mxu0 0.0
      %521 = vmatprep.subr.mxu0 0.0
      %522 = vmatpush1.msra.mxu0 0.0
      %523 = vmatprep.subr.mxu0 0.0
      %524 = vmatpush1.msra.mxu0 0.0
      %525 = vmatprep.subr.mxu0 %v414
      %526 = vmatpush1.msra.mxu0 %v412
      %527 = vmatprep.subr.mxu0 0.0
      %528 = vmatpush2.msra.mxu0 0.0
      %529 = vmatprep.subr.mxu0 0.0
      %530 = vmatpush2.msra.mxu0 0.0
      %531 = vmatprep.subr.mxu0 0.0
      %532 = vmatpush2.msra.mxu0 0.0
      %533 = vmatprep.subr.mxu0 0.0
      %534 = vmatpush2.msra.mxu0 0.0
      %535 = vmatprep.subr.mxu0 0.0
      %536 = vmatpush2.msra.mxu0 0.0
      %537 = vmatprep.subr.mxu0 0.0
      %538 = vmatpush2.msra.mxu0 0.0
      %539 = vmatprep.subr.mxu0 0.0
      %540 = vmatpush2.msra.mxu0 0.0
      %541 = vmatprep.subr.mxu0 0.0
      %542 = vmatpush2.msra.mxu0 0.0
      %543 = vmatprep.subr.mxu0 0.0
      %544 = vmatpush2.msra.mxu0 0.0
      %545 = vmatprep.subr.mxu0 0.0
      %546 = vmatpush2.msra.mxu0 0.0
      %547 = vmatprep.subr.mxu0 0.0
      %548 = vmatpush2.msra.mxu0 0.0
      %549 = vmatprep.subr.mxu0 0.0
      %550 = vmatpush2.msra.mxu0 0.0
      %551 = vmatprep.subr.mxu0 0.0
      %552 = vmatpush2.msra.mxu0 0.0
      %553 = vmatprep.subr.mxu0 0.0
      %554 = vmatpush2.msra.mxu0 0.0
      %555 = vmatprep.subr.mxu0 0.0
      %556 = vmatpush2.msra.mxu0 0.0
      %557 = vmatprep.subr.mxu0 0.0
      %558 = vmatpush2.msra.mxu0 0.0
      %559 = vmatprep.mubr.f32.mxu0 0.0
      %560 = vmatmul.mubr.f32.gmra.mxu0 %v406
      %v561 = vpop.f32.mrf.mxu0
      %v562 = vadd.f32 %v368, %v561
      %v563 = vpop.f32.mrf.mxu0
      %v564 = vadd.f32 %v372, %v563
      %565 = vdwg.mxu0
      %566 = vmatprep.subr.mxu0 0.0
      %567 = vmatpush1.msra.mxu0 0.0
      %568 = vmatprep.subr.mxu0 0.0
      %569 = vmatpush1.msra.mxu0 0.0
      %570 = vmatprep.subr.mxu0 0.0
      %571 = vmatpush1.msra.mxu0 0.0
      %572 = vmatprep.subr.mxu0 0.0
      %573 = vmatpush1.msra.mxu0 0.0
      %574 = vmatprep.subr.mxu0 0.0
      %575 = vmatpush1.msra.mxu0 0.0
      %576 = vmatprep.subr.mxu0 0.0
      %577 = vmatpush1.msra.mxu0 0.0
      %578 = vmatprep.subr.mxu0 0.0
      %579 = vmatpush1.msra.mxu0 0.0
      %580 = vmatprep.subr.mxu0 0.0
      %581 = vmatpush1.msra.mxu0 0.0
      %582 = vmatprep.subr.mxu0 0.0
      %583 = vmatpush1.msra.mxu0 0.0
      %584 = vmatprep.subr.mxu0 0.0
      %585 = vmatpush1.msra.mxu0 0.0
      %586 = vmatprep.subr.mxu0 0.0
      %587 = vmatpush1.msra.mxu0 0.0
      %588 = vmatprep.subr.mxu0 0.0
      %589 = vmatpush1.msra.mxu0 0.0
      %590 = vmatprep.subr.mxu0 0.0
      %591 = vmatpush1.msra.mxu0 0.0
      %592 = vmatprep.subr.mxu0 0.0
      %593 = vmatpush1.msra.mxu0 0.0
      %594 = vmatprep.subr.mxu0 0.0
      %595 = vmatpush1.msra.mxu0 0.0
      %596 = vmatprep.subr.mxu0 %v418
      %597 = vmatpush1.msra.mxu0 %v416
      %598 = vmatprep.subr.mxu0 0.0
      %599 = vmatpush2.msra.mxu0 0.0
      %600 = vmatprep.subr.mxu0 0.0
      %601 = vmatpush2.msra.mxu0 0.0
      %602 = vmatprep.subr.mxu0 0.0
      %603 = vmatpush2.msra.mxu0 0.0
      %604 = vmatprep.subr.mxu0 0.0
      %605 = vmatpush2.msra.mxu0 0.0
      %606 = vmatprep.subr.mxu0 0.0
      %607 = vmatpush2.msra.mxu0 0.0
      %608 = vmatprep.subr.mxu0 0.0
      %609 = vmatpush2.msra.mxu0 0.0
      %610 = vmatprep.subr.mxu0 0.0
      %611 = vmatpush2.msra.mxu0 0.0
      %612 = vmatprep.subr.mxu0 0.0
      %613 = vmatpush2.msra.mxu0 0.0
      %614 = vmatprep.subr.mxu0 0.0
      %615 = vmatpush2.msra.mxu0 0.0
      %616 = vmatprep.subr.mxu0 0.0
      %617 = vmatpush2.msra.mxu0 0.0
      %618 = vmatprep.subr.mxu0 0.0
      %619 = vmatpush2.msra.mxu0 0.0
      %620 = vmatprep.subr.mxu0 0.0
      %621 = vmatpush2.msra.mxu0 0.0
      %622 = vmatprep.subr.mxu0 0.0
      %623 = vmatpush2.msra.mxu0 0.0
      %624 = vmatprep.subr.mxu0 0.0
      %625 = vmatpush2.msra.mxu0 0.0
      %626 = vmatprep.subr.mxu0 0.0
      %627 = vmatpush2.msra.mxu0 0.0
      %628 = vmatprep.subr.mxu0 0.0
      %629 = vmatpush2.msra.mxu0 0.0
      %630 = vmatprep.mubr.f32.mxu0 0.0
      %631 = vmatmul.mubr.f32.gmra.mxu0 %v406
      %v632 = vpop.f32.mrf.mxu0
      %v633 = vadd.f32 %v376, %v632
      %v634 = vpop.f32.mrf.mxu0
      %v635 = vadd.f32 %v380, %v634
      %636 = vdwg.mxu0
      %637 = vmatprep.subr.mxu0 0.0
      %638 = vmatpush1.msra.mxu0 0.0
      %639 = vmatprep.subr.mxu0 0.0
      %640 = vmatpush1.msra.mxu0 0.0
      %641 = vmatprep.subr.mxu0 0.0
      %642 = vmatpush1.msra.mxu0 0.0
      %643 = vmatprep.subr.mxu0 0.0
      %644 = vmatpush1.msra.mxu0 0.0
      %645 = vmatprep.subr.mxu0 0.0
      %646 = vmatpush1.msra.mxu0 0.0
      %647 = vmatprep.subr.mxu0 0.0
      %648 = vmatpush1.msra.mxu0 0.0
      %649 = vmatprep.subr.mxu0 0.0
      %650 = vmatpush1.msra.mxu0 0.0
      %651 = vmatprep.subr.mxu0 0.0
      %652 = vmatpush1.msra.mxu0 0.0
      %653 = vmatprep.subr.mxu0 0.0
      %654 = vmatpush1.msra.mxu0 0.0
      %655 = vmatprep.subr.mxu0 0.0
      %656 = vmatpush1.msra.mxu0 0.0
      %657 = vmatprep.subr.mxu0 0.0
      %658 = vmatpush1.msra.mxu0 0.0
      %659 = vmatprep.subr.mxu0 0.0
      %660 = vmatpush1.msra.mxu0 0.0
      %661 = vmatprep.subr.mxu0 0.0
      %662 = vmatpush1.msra.mxu0 0.0
      %663 = vmatprep.subr.mxu0 0.0
      %664 = vmatpush1.msra.mxu0 0.0
      %665 = vmatprep.subr.mxu0 0.0
      %666 = vmatpush1.msra.mxu0 0.0
      %667 = vmatprep.subr.mxu0 %v422
      %668 = vmatpush1.msra.mxu0 %v420
      %669 = vmatprep.subr.mxu0 0.0
      %670 = vmatpush2.msra.mxu0 0.0
      %671 = vmatprep.subr.mxu0 0.0
      %672 = vmatpush2.msra.mxu0 0.0
      %673 = vmatprep.subr.mxu0 0.0
      %674 = vmatpush2.msra.mxu0 0.0
      %675 = vmatprep.subr.mxu0 0.0
      %676 = vmatpush2.msra.mxu0 0.0
      %677 = vmatprep.subr.mxu0 0.0
      %678 = vmatpush2.msra.mxu0 0.0
      %679 = vmatprep.subr.mxu0 0.0
      %680 = vmatpush2.msra.mxu0 0.0
      %681 = vmatprep.subr.mxu0 0.0
      %682 = vmatpush2.msra.mxu0 0.0
      %683 = vmatprep.subr.mxu0 0.0
      %684 = vmatpush2.msra.mxu0 0.0
      %685 = vmatprep.subr.mxu0 0.0
      %686 = vmatpush2.msra.mxu0 0.0
      %687 = vmatprep.subr.mxu0 0.0
      %688 = vmatpush2.msra.mxu0 0.0
      %689 = vmatprep.subr.mxu0 0.0
      %690 = vmatpush2.msra.mxu0 0.0
      %691 = vmatprep.subr.mxu0 0.0
      %692 = vmatpush2.msra.mxu0 0.0
      %693 = vmatprep.subr.mxu0 0.0
      %694 = vmatpush2.msra.mxu0 0.0
      %695 = vmatprep.subr.mxu0 0.0
      %696 = vmatpush2.msra.mxu0 0.0
      %697 = vmatprep.subr.mxu0 0.0
      %698 = vmatpush2.msra.mxu0 0.0
      %699 = vmatprep.subr.mxu0 0.0
      %700 = vmatpush2.msra.mxu0 0.0
      %701 = vmatprep.mubr.f32.mxu0 0.0
      %702 = vmatmul.mubr.f32.gmra.mxu0 %v406
      %v703 = vpop.f32.mrf.mxu0
      %v704 = vadd.f32 %v384, %v703
      %v705 = vpop.f32.mrf.mxu0
      %v706 = vadd.f32 %v388, %v705
      %707 = vdwg.mxu0
      %v716 = vcombine.low %v491, %v493
      %v717 = vcombine.high %v491, %v493
      %v718 = vcombine.low %v562, %v564
      %v719 = vcombine.high %v562, %v564
      %v720 = vcombine.low %v633, %v635
      %v721 = vcombine.high %v633, %v635
      %v722 = vcombine.low %v704, %v706
      %v723 = vcombine.high %v704, %v706
      %732 = vst [vmem:[#allocation3] sm:$0xff] %v716
      %733 = vst [vmem:[#allocation3 + $0x8] sm:$0xff] %v718
      %734 = vst [vmem:[#allocation3 + $0x10] sm:$0xff] %v720
      %735 = vst [vmem:[#allocation3 + $0x18] sm:$0xff] %v722
      %736 = vst [vmem:[#allocation3 + $0x20] sm:$0xff] %v717
      %737 = vst [vmem:[#allocation3 + $0x28] sm:$0xff] %v719
      %738 = vst [vmem:[#allocation3 + $0x30] sm:$0xff] %v721
      %739 = vst [vmem:[#allocation3 + $0x38] sm:$0xff] %v723
    $region21: #{tpu_custom_call.1} parent=1 // pred_fallthru
      _
    // Predicated region
    $region22: #{tpu_custom_call.1} parent=1 // pred_check
      _
    $region23: #{tpu_custom_call.1} parent=1 // pred_check_branch
      %741 = sbr.rel (0) target = $region25
    $region24: #{tpu_custom_call.1} parent=1 // pred_region
      %s743 = ssub.s32 1024, 512
      %744 = vsyncadd [#allocation4], %s743
      %s745 = sshll.u32 [#allocation3], 4
      %s746 = int_to_ptr.vmem [resolvable:$true] %s745
      %751 = dma.vmem_to_hbm [thread:$0]  %s746, 512, %s3, [#allocation4], 512, 512, 32
    $region25: #{tpu_custom_call.1} parent=1 // pred_fallthru
      _
    // Predicated region
    $region26: #{tpu_custom_call.1} parent=1 // pred_check
      _
    $region27: #{tpu_custom_call.1} parent=1 // pred_check_branch
      %753 = sbr.rel (0) target = $region29
    $region28: #{tpu_custom_call.1} parent=1 // pred_region
      %754 = dma.done [#allocation4], 1024
    $region29: #{tpu_custom_call.1} parent=1 // pred_fallthru
      _
    %755 = vsyncpa [#allocation4], 1

</llo_original>
